<compile_context>
chip_gen: v7x
topology: tpu7x:2x2x1
jax: 0.10.0
libtpu: 0.0.40
codegen_flags: <defaults>
</compile_context>

<pallas_src>
import jax
import jax.numpy as jnp
from jax.experimental import pallas as pl
from jax.experimental.pallas import tpu as pltpu

BN_EPS = 1e-5
MATMUL_DTYPE = jnp.bfloat16       # MXU operand dtype
INTERMEDIATE_DTYPE = jnp.bfloat16  # pass-1 -> pass-2 intermediate
LANE = 128
_VMEM_LIMIT = 40 * 1024 * 1024    # scoped VMEM limit (headroom on v7x's 64 MiB)
_CONV_TILE_ROWS = 512             # pass-1 M tile (MXU pass, v5e-friendly)
_BN_TILE_ROWS = 2048              # pass-2 M tile (pure HBM streaming)


def _round_up(x, m):
    return (x + m - 1) // m * m


# ---------------------------------------------------------------------------
# Pass 1 kernel: K-packed im2col conv.  One bf16 MXU matmul per M tile
# (contraction over Kp = round_up(9*Cin, 128)), f32 accumulate, + bias.
# Emits bf16 y and per-tile BN partials (sum, sum_sq) taken on the PRE-bias
# accumulator.
#   x_ref    : [TM, Kp]    bf16   (K-packed im2col rows)
#   w_ref    : [Kp, Cop]   bf16   (resident)
#   bias_ref : [1, Cop]    f32    (resident)
#   y_ref    : [TM, Cop]   bf16
#   stats_ref: [1, 2, Cop] f32
# ---------------------------------------------------------------------------
def _conv_stats_kernel(x_ref, w_ref, bias_ref, y_ref, stats_ref):
    acc = jnp.dot(x_ref[...], w_ref[...], preferred_element_type=jnp.float32)
    s1 = jnp.sum(acc, axis=0, keepdims=True)           # [1, Cop]
    s2 = jnp.sum(acc * acc, axis=0, keepdims=True)      # [1, Cop]
    stats_ref[...] = jnp.concatenate([s1, s2], axis=0)[None]   # [1, 2, Cop]
    y_ref[...] = (acc + bias_ref[...]).astype(y_ref.dtype)


# ---------------------------------------------------------------------------
# Pass 2 kernel (final stage only): y * scale + shift -> ReLU on lane-dense
# [TM, Cop] tiles.  y is bf16; all math in f32.
# ---------------------------------------------------------------------------
def _bn_relu_kernel(y_ref, scale_ref, shift_ref, out_ref):
    y = y_ref[...].astype(jnp.float32)
    out_ref[...] = jnp.maximum(y * scale_ref[...] + shift_ref[...], 0.0)


def _im2col(x_nhwc, stride):
    """Halo-pad and K-pack the 3x3 taps: returns [N, Ho, Wo, 9*Cin]."""
    n, h, w, cin = x_nhwc.shape
    ho = (h + 2 - 3) // stride + 1
    wo = (w + 2 - 3) // stride + 1
    xp = jnp.pad(x_nhwc, ((0, 0), (1, 1), (1, 1), (0, 0)))
    taps = []
    for kh in range(3):
        for kw in range(3):
            taps.append(xp[:,
                           kh:kh + (ho - 1) * stride + 1:stride,
                           kw:kw + (wo - 1) * stride + 1:stride, :])
    return jnp.concatenate(taps, axis=-1), ho, wo


def conv_bn_relu(x_nhwc, w_hwio, bias, gamma, beta, stride, *, pallas_bn):
    n, h, w, cin = x_nhwc.shape
    cout = w_hwio.shape[-1]
    k = 9 * cin
    kp = _round_up(k, LANE)                              # packed contraction dim
    cop = _round_up(cout, LANE)                          # lane-dense output pad

    # Host glue: halo pad + tap packing + zero-pad rows/K + bf16 cast.
    patches, ho, wo = _im2col(x_nhwc, stride)            # [N, Ho, Wo, 9*Cin]
    m = n * ho * wo
    tm = min(_CONV_TILE_ROWS, _round_up(m, 8))
    mp = _round_up(m, tm)
    x_mat = patches.reshape(m, k)
    # Zero-padded rows/K-columns contribute exactly 0 to the BN partial sums.
    x_mat = jnp.pad(x_mat, ((0, mp - m), (0, kp - k))).astype(MATMUL_DTYPE)

    w_mat = jnp.pad(w_hwio.reshape(k, cout),
                    ((0, kp - k), (0, cop - cout))).astype(MATMUL_DTYPE)
    bias_p = jnp.pad(bias, (0, cop - cout)).reshape(1, cop).astype(jnp.float32)

    n_tiles = mp // tm
    y, stats = pl.pallas_call(
        _conv_stats_kernel,
        grid=(n_tiles,),
        in_specs=[
            pl.BlockSpec((tm, kp), lambda i: (i, 0)),
            pl.BlockSpec((kp, cop), lambda i: (0, 0)),    # weights resident
            pl.BlockSpec((1, cop), lambda i: (0, 0)),     # bias resident
        ],
        out_specs=[
            pl.BlockSpec((tm, cop), lambda i: (i, 0)),
            pl.BlockSpec((1, 2, cop), lambda i: (i, 0, 0)),
        ],
        out_shape=[
            jax.ShapeDtypeStruct((mp, cop), INTERMEDIATE_DTYPE),
            jax.ShapeDtypeStruct((n_tiles, 2, cop), jnp.float32),
        ],
        compiler_params=pltpu.CompilerParams(
            dimension_semantics=("parallel",),
            vmem_limit_bytes=_VMEM_LIMIT),
    )(x_mat, w_mat, bias_p)

    # Global batch statistics (tiny [2, Cop] reduction in plain JAX).
    # Partials were taken on z = y - bias (per-channel shift); fold bias back.
    totals = jnp.sum(stats, axis=0)                      # [2, Cop]
    mean_z = totals[0] / m
    var = jnp.maximum(totals[1] / m - mean_z * mean_z, 0.0)
    mean = mean_z + bias_p[0]
    inv = jax.lax.rsqrt(var + BN_EPS)
    gamma_p = jnp.pad(gamma, (0, cop - cout))
    beta_p = jnp.pad(beta, (0, cop - cout))
    scale = (gamma_p * inv).reshape(1, cop).astype(jnp.float32)
    shift = (beta_p - mean * gamma_p * inv).reshape(1, cop).astype(jnp.float32)

    if pallas_bn:
        # Final stage: streaming lane-dense Pallas BN+ReLU (bf16 in, f32 out).
        tb = min(_BN_TILE_ROWS, mp)
        out = pl.pallas_call(
            _bn_relu_kernel,
            grid=(pl.cdiv(mp, tb),),
            in_specs=[
                pl.BlockSpec((tb, cop), lambda i: (i, 0)),
                pl.BlockSpec((1, cop), lambda i: (0, 0)),
                pl.BlockSpec((1, cop), lambda i: (0, 0)),
            ],
            out_specs=pl.BlockSpec((tb, cop), lambda i: (i, 0)),
            out_shape=jax.ShapeDtypeStruct((mp, cop), jnp.float32),
            compiler_params=pltpu.CompilerParams(
                dimension_semantics=("parallel",),
                vmem_limit_bytes=_VMEM_LIMIT),
        )(y, scale, shift)
    else:
        # Intermediate stage: BN+ReLU folds into the next stage's im2col glue
        # (XLA fuses the elementwise into pad/slice/concat) -> no dedicated
        # HBM round trip for the normalized activation.
        out = jnp.maximum(y.astype(jnp.float32) * scale + shift, 0.0)

    return out[:m].reshape(n, ho, wo, cop)[:, :, :, :cout]


# ---------------------------------------------------------------------------
# double_conv2 forward (NCHW in / NCHW out, matching the PyTorch module)
# ---------------------------------------------------------------------------
def double_conv2_forward(x_nchw, params):
    x = jnp.transpose(x_nchw, (0, 2, 3, 1))              # NCHW -> NHWC
    x = conv_bn_relu(x, params["w1"], params["b1"], params["g1"], params["be1"],
                     stride=2, pallas_bn=False)
    x = conv_bn_relu(x, params["w2"], params["b2"], params["g2"], params["be2"],
                     stride=1, pallas_bn=True)
    return jnp.transpose(x, (0, 3, 1, 2))                # NHWC -> NCHW


# ---------------------------------------------------------------------------
# Pure-JAX references.  conv_dtype selects conv operand precision so the
# kernel (bf16 MXU operands) can be checked tightly against a bf16-consistent
# reference and loosely against exact-f32 (PyTorch) math.
# ---------------------------------------------------------------------------
def _ref_stage(x, w, b, g, be, stride, conv_dtype):
    y = jax.lax.conv_general_dilated(
        x.astype(conv_dtype), w.astype(conv_dtype),
        window_strides=(stride, stride), padding=((1, 1), (1, 1)),
        dimension_numbers=("NHWC", "HWIO", "NHWC"),
        preferred_element_type=jnp.float32) + b
    mean = y.mean(axis=(0, 1, 2))
    var = ((y - mean) ** 2).mean(axis=(0, 1, 2))          # biased (training BN)
    yn = (y - mean) * jax.lax.rsqrt(var + BN_EPS)
    return jnp.maximum(g * yn + be, 0.0)


def _ref_forward(x_nchw, p, conv_dtype):
    x = jnp.transpose(x_nchw, (0, 2, 3, 1))
    x = _ref_stage(x, p["w1"], p["b1"], p["g1"], p["be1"], 2, conv_dtype)
    x = _ref_stage(x, p["w2"], p["b2"], p["g2"], p["be2"], 1, conv_dtype)
    return jnp.transpose(x, (0, 3, 1, 2))


def init_params(key, in_ch, out_ch):
    k1, k2, k3, k4 = jax.random.split(key, 4)
    return {
        # conv weights stored HWIO = [3, 3, Cin, Cout]
        "w1": 0.1 * jax.random.normal(k1, (3, 3, in_ch, out_ch), jnp.float32),
        "b1": 0.05 * jax.random.normal(k2, (out_ch,), jnp.float32),
        "g1": jnp.ones((out_ch,), jnp.float32),           # BatchNorm2d defaults
        "be1": jnp.zeros((out_ch,), jnp.float32),
        "w2": 0.1 * jax.random.normal(k3, (3, 3, out_ch, out_ch), jnp.float32),
        "b2": 0.05 * jax.random.normal(k4, (out_ch,), jnp.float32),
        "g2": jnp.ones((out_ch,), jnp.float32),
        "be2": jnp.zeros((out_ch,), jnp.float32),
    }


if __name__ == "__main__":
    key = jax.random.PRNGKey(0)
    kx, kp = jax.random.split(key)

    in_ch, out_ch = 4, 8
    x = jax.random.normal(kx, (2, in_ch, 16, 16), jnp.float32)   # NCHW
    params = init_params(kp, in_ch, out_ch)

    out = jax.block_until_ready(jax.jit(double_conv2_forward)(x, params))
    assert out.shape == (2, out_ch, 8, 8), out.shape             # stride-2 halves H, W

    # Tight check vs. a reference using the same bf16 conv-operand precision.
    ref_bf16 = jax.block_until_ready(_ref_forward(x, params, MATMUL_DTYPE))
    assert jnp.allclose(out, ref_bf16, rtol=3e-2, atol=3e-2), \
        float(jnp.max(jnp.abs(out - ref_bf16)))

    # Loose check vs. exact-f32 (PyTorch-equivalent) math; deviation is bf16
    # rounding of MXU operands and the bf16 intermediate.
    ref_f32 = jax.block_until_ready(_ref_forward(x, params, jnp.float32))
    assert jnp.allclose(out, ref_f32, rtol=1e-1, atol=1e-1)

    print("KERNEL_OK")
</pallas_src>

<mosaic_0001>
module attributes {stable_mosaic.version = 11 : i64} {
  func.func @_conv_stats_kernel(%arg0: i32, %arg1: memref<128x128xbf16, #tpu.memory_space<vmem>>, %arg2: memref<128x128xbf16, #tpu.memory_space<vmem>>, %arg3: memref<1x128xf32, #tpu.memory_space<vmem>>, %arg4: memref<128x128xbf16, #tpu.memory_space<vmem>>, %arg5: memref<1x2x128xf32, #tpu.memory_space<vmem>>) attributes {dimension_semantics = [#tpu.dimension_semantics<parallel>], iteration_bounds = array<i64: 1>, scalar_prefetch = 0 : i64, scratch_operands = 0 : i64, tpu.core_type = #tpu.core_type<tc>, window_params = [{transform_indices = @transform_0, window_bounds = array<i64: 128, 128>}, {pipeline_mode = #tpu.pipeline_mode<synchronous>, transform_indices = @transform_1, window_bounds = array<i64: 128, 128>}, {pipeline_mode = #tpu.pipeline_mode<synchronous>, transform_indices = @transform_2, window_bounds = array<i64: 1, 128>}, {transform_indices = @transform_3, window_bounds = array<i64: 128, 128>}, {transform_indices = @transform_4, window_bounds = array<i64: 1, 2, 128>}]} {
    %c0 = arith.constant 0 : index
    %c0_0 = arith.constant 0 : index
    %0 = vector.load %arg1[%c0, %c0_0] : memref<128x128xbf16, #tpu.memory_space<vmem>>, vector<128x128xbf16>
    %c0_1 = arith.constant 0 : index
    %c0_2 = arith.constant 0 : index
    %1 = vector.load %arg2[%c0_1, %c0_2] : memref<128x128xbf16, #tpu.memory_space<vmem>>, vector<128x128xbf16>
    %cst = arith.constant dense<0.000000e+00> : vector<128x128xf32>
    %2 = tpu.matmul %0, %1, %cst {dimension_numbers = #tpu.dot_dimension_numbers<[1], [0], [0], [1], [0, 0, 1, 1], [], []>} : vector<128x128xbf16>, vector<128x128xbf16>, vector<128x128xf32> -> vector<128x128xf32>
    %cst_3 = arith.constant dense<0.000000e+00> : vector<128xf32>
    %3 = vector.multi_reduction <add>, %2, %cst_3 [0] : vector<128x128xf32> to vector<128xf32>
    %4 = vector.shape_cast %3 : vector<128xf32> to vector<1x128xf32>
    %5 = arith.mulf %2, %2 : vector<128x128xf32>
    %cst_4 = arith.constant dense<0.000000e+00> : vector<128xf32>
    %6 = vector.multi_reduction <add>, %5, %cst_4 [0] : vector<128x128xf32> to vector<128xf32>
    %7 = vector.shape_cast %6 : vector<128xf32> to vector<1x128xf32>
    %8 = tpu.concatenate %4, %7 in 0 : vector<1x128xf32>, vector<1x128xf32> -> vector<2x128xf32>
    %9 = vector.shape_cast %8 : vector<2x128xf32> to vector<1x2x128xf32>
    %c0_5 = arith.constant 0 : index
    %c0_6 = arith.constant 0 : index
    %c0_7 = arith.constant 0 : index
    %10 = vector.load %arg5[%c0_5, %c0_6, %c0_7] : memref<1x2x128xf32, #tpu.memory_space<vmem>>, vector<1x2x128xf32>
    tpu.vector_store %arg5[%c0_5, %c0_6, %c0_7], %9 {strides = array<i32>} : memref<1x2x128xf32, #tpu.memory_space<vmem>>, vector<1x2x128xf32>,
    %c0_8 = arith.constant 0 : index
    %c0_9 = arith.constant 0 : index
    %11 = vector.load %arg3[%c0_8, %c0_9] : memref<1x128xf32, #tpu.memory_space<vmem>>, vector<1x128xf32>
    %12 = vector.broadcast %11 : vector<1x128xf32> to vector<128x128xf32>
    %13 = arith.addf %2, %12 : vector<128x128xf32>
    %14 = arith.truncf %13 : vector<128x128xf32> to vector<128x128xbf16>
    %c0_10 = arith.constant 0 : index
    %c0_11 = arith.constant 0 : index
    %15 = vector.load %arg4[%c0_10, %c0_11] : memref<128x128xbf16, #tpu.memory_space<vmem>>, vector<128x128xbf16>
    tpu.vector_store %arg4[%c0_10, %c0_11], %14 {strides = array<i32>} : memref<128x128xbf16, #tpu.memory_space<vmem>>, vector<128x128xbf16>,
    return
  }
  func.func @transform_0(%arg0: i32) -> (i32, i32) {
    %c0_i32 = arith.constant 0 : i32
    %c0_i32_0 = arith.constant 0 : i32
    return %arg0, %c0_i32 : i32, i32
  }
  func.func @transform_1(%arg0: i32) -> (i32, i32) {
    %c0_i32 = arith.constant 0 : i32
    %c0_i32_0 = arith.constant 0 : i32
    %c0_i32_1 = arith.constant 0 : i32
    return %c0_i32, %c0_i32_0 : i32, i32
  }
  func.func @transform_2(%arg0: i32) -> (i32, i32) {
    %c0_i32 = arith.constant 0 : i32
    %c0_i32_0 = arith.constant 0 : i32
    %c0_i32_1 = arith.constant 0 : i32
    return %c0_i32, %c0_i32_0 : i32, i32
  }
  func.func @transform_3(%arg0: i32) -> (i32, i32) {
    %c0_i32 = arith.constant 0 : i32
    %c0_i32_0 = arith.constant 0 : i32
    return %arg0, %c0_i32 : i32, i32
  }
  func.func @transform_4(%arg0: i32) -> (i32, i32, i32) {
    %c0_i32 = arith.constant 0 : i32
    %c0_i32_0 = arith.constant 0 : i32
    %c0_i32_1 = arith.constant 0 : i32
    return %arg0, %c0_i32, %c0_i32_0 : i32, i32, i32
  }
}

module attributes {stable_mosaic.version = 11 : i64} {
  func.func @_bn_relu_kernel(%arg0: i32, %arg1: memref<128x128xbf16, #tpu.memory_space<vmem>>, %arg2: memref<1x128xf32, #tpu.memory_space<vmem>>, %arg3: memref<1x128xf32, #tpu.memory_space<vmem>>, %arg4: memref<128x128xf32, #tpu.memory_space<vmem>>) attributes {dimension_semantics = [#tpu.dimension_semantics<parallel>], iteration_bounds = array<i64: 1>, scalar_prefetch = 0 : i64, scratch_operands = 0 : i64, tpu.core_type = #tpu.core_type<tc>, window_params = [{transform_indices = @transform_0, window_bounds = array<i64: 128, 128>}, {pipeline_mode = #tpu.pipeline_mode<synchronous>, transform_indices = @transform_1, window_bounds = array<i64: 1, 128>}, {pipeline_mode = #tpu.pipeline_mode<synchronous>, transform_indices = @transform_2, window_bounds = array<i64: 1, 128>}, {transform_indices = @transform_3, window_bounds = array<i64: 128, 128>}]} {
    %c0 = arith.constant 0 : index
    %c0_0 = arith.constant 0 : index
    %0 = vector.load %arg1[%c0, %c0_0] : memref<128x128xbf16, #tpu.memory_space<vmem>>, vector<128x128xbf16>
    %1 = arith.extf %0 : vector<128x128xbf16> to vector<128x128xf32>
    %c0_1 = arith.constant 0 : index
    %c0_2 = arith.constant 0 : index
    %2 = vector.load %arg2[%c0_1, %c0_2] : memref<1x128xf32, #tpu.memory_space<vmem>>, vector<1x128xf32>
    %3 = vector.broadcast %2 : vector<1x128xf32> to vector<128x128xf32>
    %4 = arith.mulf %1, %3 : vector<128x128xf32>
    %c0_3 = arith.constant 0 : index
    %c0_4 = arith.constant 0 : index
    %5 = vector.load %arg3[%c0_3, %c0_4] : memref<1x128xf32, #tpu.memory_space<vmem>>, vector<1x128xf32>
    %6 = vector.broadcast %5 : vector<1x128xf32> to vector<128x128xf32>
    %7 = arith.addf %4, %6 : vector<128x128xf32>
    %cst = arith.constant 0.000000e+00 : f32
    %8 = vector.broadcast %cst : f32 to vector<128x128xf32>
    %9 = arith.maximumf %7, %8 : vector<128x128xf32>
    %c0_5 = arith.constant 0 : index
    %c0_6 = arith.constant 0 : index
    %10 = vector.load %arg4[%c0_5, %c0_6] : memref<128x128xf32, #tpu.memory_space<vmem>>, vector<128x128xf32>
    tpu.vector_store %arg4[%c0_5, %c0_6], %9 {strides = array<i32>} : memref<128x128xf32, #tpu.memory_space<vmem>>, vector<128x128xf32>,
    return
  }
  func.func @transform_0(%arg0: i32) -> (i32, i32) {
    %c0_i32 = arith.constant 0 : i32
    %c0_i32_0 = arith.constant 0 : i32
    return %arg0, %c0_i32 : i32, i32
  }
  func.func @transform_1(%arg0: i32) -> (i32, i32) {
    %c0_i32 = arith.constant 0 : i32
    %c0_i32_0 = arith.constant 0 : i32
    %c0_i32_1 = arith.constant 0 : i32
    return %c0_i32, %c0_i32_0 : i32, i32
  }
  func.func @transform_2(%arg0: i32) -> (i32, i32) {
    %c0_i32 = arith.constant 0 : i32
    %c0_i32_0 = arith.constant 0 : i32
    %c0_i32_1 = arith.constant 0 : i32
    return %c0_i32, %c0_i32_0 : i32, i32
  }
  func.func @transform_3(%arg0: i32) -> (i32, i32) {
    %c0_i32 = arith.constant 0 : i32
    %c0_i32_0 = arith.constant 0 : i32
    return %arg0, %c0_i32 : i32, i32
  }
}

</mosaic_0001>

<llo_original>
// kernel: double_conv2_forward.3
$region0: #{double_conv2_forward.3}
  #allocation0 [shape = 'u32[]', space=smem, size = 0x4, offset = 0x4, fixed_abs, tag = 'smem constant byte address 0x4 - core index']
  #allocation1 [shape = 'u32[144,128]{1,0:T(1,128)}', space=vmem, size = 0x12000, scoped, tag = 'internal scratch']
  %s0 = inlined_call_operand.vmem [shape: bf16[128,128], index: 0, kind: input, shape index: {}]
  %s1 = inlined_call_operand.vmem [shape: bf16[128,128], index: 1, kind: input, shape index: {}]
  %s2 = inlined_call_operand.vmem [shape: f32[1,128], index: 2, kind: input, shape index: {}]
  %s3 = inlined_call_operand.vmem [shape: bf16[128,128], index: 3, kind: output, shape index: {0}]
  %s4 = inlined_call_operand.vmem [shape: f32[1,2,128], index: 4, kind: output, shape index: {1}]
  %5 = xla_tuple %s3, %s4
  %s6 = sld [smem:[#allocation0]]
  $region30: #{double_conv2_forward.3} parent=0
    _
  %s8 = ssub.s32 1, %s6
  %s9 = scalar_select 0, %s8, %s6
  // Predicated region
  $region2: #{double_conv2_forward.3} parent=0 // pred_check
    _
  $region3: #{double_conv2_forward.3} parent=0 // pred_check_branch
    %11 = sbr.rel (0) target = $region5
  $region4: #{double_conv2_forward.3} parent=0 // pred_region
    _
  $region5: #{double_conv2_forward.3} parent=0 // pred_fallthru
    _
  // Predicated region
  $region6: #{double_conv2_forward.3} parent=0 // pred_check
    _
  $region7: #{double_conv2_forward.3} parent=0 // pred_check_branch
    %13 = sbr.rel (0) target = $region9
  $region8: #{double_conv2_forward.3} parent=0 // pred_region
    _
  $region9: #{double_conv2_forward.3} parent=0 // pred_fallthru
    _
  // Predicated region
  $region10: #{double_conv2_forward.3} parent=0 // pred_check
    _
  $region11: #{double_conv2_forward.3} parent=0 // pred_check_branch
    %15 = sbr.rel (0) target = $region13
  $region12: #{double_conv2_forward.3} parent=0 // pred_region
    _
  $region13: #{double_conv2_forward.3} parent=0 // pred_fallthru
    _
  %v17 = vld [vmem:[%s0] sm:$0xf]
  %v18 = vld [vmem:[%s0 + $0x4] sm:$0xf]
  %v19 = vld [vmem:[%s0 + $0x8] sm:$0xf]
  %v20 = vld [vmem:[%s0 + $0xc] sm:$0xf]
  %v21 = vld [vmem:[%s0 + $0x10] sm:$0xf]
  %v22 = vld [vmem:[%s0 + $0x14] sm:$0xf]
  %v23 = vld [vmem:[%s0 + $0x18] sm:$0xf]
  %v24 = vld [vmem:[%s0 + $0x1c] sm:$0xf]
  %v25 = vld [vmem:[%s0 + $0x20] sm:$0xf]
  %v26 = vld [vmem:[%s0 + $0x24] sm:$0xf]
  %v27 = vld [vmem:[%s0 + $0x28] sm:$0xf]
  %v28 = vld [vmem:[%s0 + $0x2c] sm:$0xf]
  %v29 = vld [vmem:[%s0 + $0x30] sm:$0xf]
  %v30 = vld [vmem:[%s0 + $0x34] sm:$0xf]
  %v31 = vld [vmem:[%s0 + $0x38] sm:$0xf]
  %v32 = vld [vmem:[%s0 + $0x3c] sm:$0xf]
  %v33 = vld [vmem:[%s1] sm:$0xf]
  %v34 = vld [vmem:[%s1 + $0x4] sm:$0xf]
  %v35 = vld [vmem:[%s1 + $0x8] sm:$0xf]
  %v36 = vld [vmem:[%s1 + $0xc] sm:$0xf]
  %v37 = vld [vmem:[%s1 + $0x10] sm:$0xf]
  %v38 = vld [vmem:[%s1 + $0x14] sm:$0xf]
  %v39 = vld [vmem:[%s1 + $0x18] sm:$0xf]
  %v40 = vld [vmem:[%s1 + $0x1c] sm:$0xf]
  %v41 = vld [vmem:[%s1 + $0x20] sm:$0xf]
  %v42 = vld [vmem:[%s1 + $0x24] sm:$0xf]
  %v43 = vld [vmem:[%s1 + $0x28] sm:$0xf]
  %v44 = vld [vmem:[%s1 + $0x2c] sm:$0xf]
  %v45 = vld [vmem:[%s1 + $0x30] sm:$0xf]
  %v46 = vld [vmem:[%s1 + $0x34] sm:$0xf]
  %v47 = vld [vmem:[%s1 + $0x38] sm:$0xf]
  %v48 = vld [vmem:[%s1 + $0x3c] sm:$0xf]
  %v65 = vunpack.c.l.b16 %v17
  %v66 = vunpack.c.l.b16 %v18
  %v67 = vunpack.c.l.b16 %v19
  %v68 = vunpack.c.l.b16 %v20
  %v69 = vunpack.c.l.b16 %v21
  %v70 = vunpack.c.l.b16 %v22
  %v71 = vunpack.c.l.b16 %v23
  %v72 = vunpack.c.l.b16 %v24
  %v73 = vunpack.c.l.b16 %v25
  %v74 = vunpack.c.l.b16 %v26
  %v75 = vunpack.c.l.b16 %v27
  %v76 = vunpack.c.l.b16 %v28
  %v77 = vunpack.c.l.b16 %v29
  %v78 = vunpack.c.l.b16 %v30
  %v79 = vunpack.c.l.b16 %v31
  %v80 = vunpack.c.l.b16 %v32
  %v81 = vpack.c.b16 %v66, %v65
  %v82 = vpack.c.b16 %v68, %v67
  %v83 = vpack.c.b16 %v70, %v69
  %v84 = vpack.c.b16 %v72, %v71
  %v85 = vpack.c.b16 %v74, %v73
  %v86 = vpack.c.b16 %v76, %v75
  %v87 = vpack.c.b16 %v78, %v77
  %v88 = vpack.c.b16 %v80, %v79
  %v113 = vunpack.c.l.b16 %v33
  %v114 = vunpack.c.l.b16 %v34
  %v115 = vunpack.c.l.b16 %v35
  %v116 = vunpack.c.l.b16 %v36
  %v117 = vunpack.c.l.b16 %v37
  %v118 = vunpack.c.l.b16 %v38
  %v119 = vunpack.c.l.b16 %v39
  %v120 = vunpack.c.l.b16 %v40
  %v121 = vunpack.c.l.b16 %v41
  %v122 = vunpack.c.l.b16 %v42
  %v123 = vunpack.c.l.b16 %v43
  %v124 = vunpack.c.l.b16 %v44
  %v125 = vunpack.c.l.b16 %v45
  %v126 = vunpack.c.l.b16 %v46
  %v127 = vunpack.c.l.b16 %v47
  %v128 = vunpack.c.l.b16 %v48
  %v129 = vpack.c.b16 %v114, %v113
  %v130 = vpack.c.b16 %v116, %v115
  %v131 = vpack.c.b16 %v118, %v117
  %v132 = vpack.c.b16 %v120, %v119
  %v133 = vpack.c.b16 %v122, %v121
  %v134 = vpack.c.b16 %v124, %v123
  %v135 = vpack.c.b16 %v126, %v125
  %v136 = vpack.c.b16 %v128, %v127
  %145 = vmatprep.subr.bf16.mxu0 0
  %146 = vmatpush1.bf16.msra.mxu0 %v129
  %147 = vmatprep.subr.bf16.mxu0 0
  %148 = vmatpush1.bf16.msra.mxu0 %v130
  %149 = vmatprep.subr.bf16.mxu0 0
  %150 = vmatpush1.bf16.msra.mxu0 %v131
  %151 = vmatprep.subr.bf16.mxu0 0
  %152 = vmatpush1.bf16.msra.mxu0 %v132
  %153 = vmatprep.subr.bf16.mxu0 0
  %154 = vmatpush1.bf16.msra.mxu0 %v133
  %155 = vmatprep.subr.bf16.mxu0 0
  %156 = vmatpush1.bf16.msra.mxu0 %v134
  %157 = vmatprep.subr.bf16.mxu0 0
  %158 = vmatpush1.bf16.msra.mxu0 %v135
  %159 = vmatprep.subr.bf16.mxu0 0
  %160 = vmatpush1.bf16.msra.mxu0 %v136
  %161 = vmatprep.subr.bf16.mxu0 0
  %162 = vmatpush1.bf16.msra.mxu0 0
  %163 = vmatprep.subr.bf16.mxu0 0
  %164 = vmatpush1.bf16.msra.mxu0 0
  %165 = vmatprep.subr.bf16.mxu0 0
  %166 = vmatpush1.bf16.msra.mxu0 0
  %167 = vmatprep.subr.bf16.mxu0 0
  %168 = vmatpush1.bf16.msra.mxu0 0
  %169 = vmatprep.subr.bf16.mxu0 0
  %170 = vmatpush1.bf16.msra.mxu0 0
  %171 = vmatprep.subr.bf16.mxu0 0
  %172 = vmatpush1.bf16.msra.mxu0 0
  %173 = vmatprep.subr.bf16.mxu0 0
  %174 = vmatpush1.bf16.msra.mxu0 0
  %175 = vmatprep.subr.bf16.mxu0 0
  %176 = vmatpush1.bf16.msra.mxu0 0
  %177 = vmatprep.mubr.bf16.mxu0 0
  %178 = vmatmul.mubr.bf16.gmra.mrb[0].mxu0 %v81
  %v179 = vpop.f32.mrb[0].mxu0
  %v180 = vadd.f32 0.0, %v179
  %v181 = vpop.f32.mrb[0].mxu0
  %v182 = vpop.f32.mrb[0].mxu0
  %v183 = vadd.f32 0.0, %v182
  %v184 = vpop.f32.mrb[0].mxu0
  %185 = vmatprep.mubr.bf16.mxu0 0
  %186 = vmatmul.mubr.bf16.gmra.mrb[0].mxu0 %v82
  %v187 = vpop.f32.mrb[0].mxu0
  %v188 = vadd.f32 0.0, %v187
  %v189 = vpop.f32.mrb[0].mxu0
  %v190 = vpop.f32.mrb[0].mxu0
  %v191 = vadd.f32 0.0, %v190
  %v192 = vpop.f32.mrb[0].mxu0
  %193 = vmatprep.mubr.bf16.mxu0 0
  %194 = vmatmul.mubr.bf16.gmra.mrb[0].mxu0 %v83
  %v195 = vpop.f32.mrb[0].mxu0
  %v196 = vadd.f32 0.0, %v195
  %v197 = vpop.f32.mrb[0].mxu0
  %v198 = vpop.f32.mrb[0].mxu0
  %v199 = vadd.f32 0.0, %v198
  %v200 = vpop.f32.mrb[0].mxu0
  %201 = vmatprep.mubr.bf16.mxu0 0
  %202 = vmatmul.mubr.bf16.gmra.mrb[0].mxu0 %v84
  %v203 = vpop.f32.mrb[0].mxu0
  %v204 = vadd.f32 0.0, %v203
  %v205 = vpop.f32.mrb[0].mxu0
  %v206 = vpop.f32.mrb[0].mxu0
  %v207 = vadd.f32 0.0, %v206
  %v208 = vpop.f32.mrb[0].mxu0
  %209 = vmatprep.mubr.bf16.mxu0 0
  %210 = vmatmul.mubr.bf16.gmra.mrb[0].mxu0 %v85
  %v211 = vpop.f32.mrb[0].mxu0
  %v212 = vadd.f32 0.0, %v211
  %v213 = vpop.f32.mrb[0].mxu0
  %v214 = vpop.f32.mrb[0].mxu0
  %v215 = vadd.f32 0.0, %v214
  %v216 = vpop.f32.mrb[0].mxu0
  %217 = vmatprep.mubr.bf16.mxu0 0
  %218 = vmatmul.mubr.bf16.gmra.mrb[0].mxu0 %v86
  %v219 = vpop.f32.mrb[0].mxu0
  %v220 = vadd.f32 0.0, %v219
  %v221 = vpop.f32.mrb[0].mxu0
  %v222 = vpop.f32.mrb[0].mxu0
  %v223 = vadd.f32 0.0, %v222
  %v224 = vpop.f32.mrb[0].mxu0
  %225 = vmatprep.mubr.bf16.mxu0 0
  %226 = vmatmul.mubr.bf16.gmra.mrb[0].mxu0 %v87
  %v227 = vpop.f32.mrb[0].mxu0
  %v228 = vadd.f32 0.0, %v227
  %v229 = vpop.f32.mrb[0].mxu0
  %v230 = vpop.f32.mrb[0].mxu0
  %v231 = vadd.f32 0.0, %v230
  %v232 = vpop.f32.mrb[0].mxu0
  %233 = vmatprep.mubr.bf16.mxu0 0
  %234 = vmatmul.mubr.bf16.gmra.mrb[0].mxu0 %v88
  %v235 = vpop.f32.mrb[0].mxu0
  %v236 = vadd.f32 0.0, %v235
  %v237 = vpop.f32.mrb[0].mxu0
  %v238 = vpop.f32.mrb[0].mxu0
  %v239 = vadd.f32 0.0, %v238
  %v240 = vpop.f32.mrb[0].mxu0
  %241 = vdwg.mxu0
  %v242 = vadd.f32 %v180, %v183
  %v243 = vadd.f32 %v242, %v188
  %v244 = vadd.f32 %v243, %v191
  %v245 = vadd.f32 %v244, %v196
  %v246 = vadd.f32 %v245, %v199
  %v247 = vadd.f32 %v246, %v204
  %v248 = vadd.f32 %v247, %v207
  %v249 = vadd.f32 %v248, %v212
  %v250 = vadd.f32 %v249, %v215
  %v251 = vadd.f32 %v250, %v220
  %v252 = vadd.f32 %v251, %v223
  %v253 = vadd.f32 %v252, %v228
  %v254 = vadd.f32 %v253, %v231
  %v255 = vadd.f32 %v254, %v236
  %v256 = vadd.f32 %v255, %v239
  %v257 = vrot.slane %v256, 4
  %v258 = vadd.f32 %v256, %v257
  %v259 = vrot.slane %v258, 2
  %v260 = vadd.f32 %v258, %v259
  %v261 = vrot.slane %v260, 1
  %v262 = vadd.f32 %v260, %v261
  %v263 = vmul.f32 %v180, %v180
  %v264 = vmul.f32 %v183, %v183
  %v265 = vmul.f32 %v188, %v188
  %v266 = vmul.f32 %v191, %v191
  %v267 = vmul.f32 %v196, %v196
  %v268 = vmul.f32 %v199, %v199
  %v269 = vmul.f32 %v204, %v204
  %v270 = vmul.f32 %v207, %v207
  %v271 = vmul.f32 %v212, %v212
  %v272 = vmul.f32 %v215, %v215
  %v273 = vmul.f32 %v220, %v220
  %v274 = vmul.f32 %v223, %v223
  %v275 = vmul.f32 %v228, %v228
  %v276 = vmul.f32 %v231, %v231
  %v277 = vmul.f32 %v236, %v236
  %v278 = vmul.f32 %v239, %v239
  %v279 = vadd.f32 %v263, %v264
  %v280 = vadd.f32 %v279, %v265
  %v281 = vadd.f32 %v280, %v266
  %v282 = vadd.f32 %v281, %v267
  %v283 = vadd.f32 %v282, %v268
  %v284 = vadd.f32 %v283, %v269
  %v285 = vadd.f32 %v284, %v270
  %v286 = vadd.f32 %v285, %v271
  %v287 = vadd.f32 %v286, %v272
  %v288 = vadd.f32 %v287, %v273
  %v289 = vadd.f32 %v288, %v274
  %v290 = vadd.f32 %v289, %v275
  %v291 = vadd.f32 %v290, %v276
  %v292 = vadd.f32 %v291, %v277
  %v293 = vadd.f32 %v292, %v278
  %v294 = vrot.slane %v293, 4
  %v295 = vadd.f32 %v293, %v294
  %v296 = vrot.slane %v295, 2
  %v297 = vadd.f32 %v295, %v296
  %v298 = vrot.slane %v297, 1
  %v299 = vadd.f32 %v297, %v298
  %vm300 = vcmask 1040384
  %v301 = vsel %vm300, %v262, %v299
  %302 = vst [vmem:[%s4] sm:$0x3] %v301
  %v303 = vld [vmem:[%s2] sm:$0x1]
  %v305 = vlaneseq
  %v306 = vshrl.u32 %v305, 7
  %v307 = vsub.s32 0, %v306
  %v308 = vrot.slane %v303, %v307
  %v310 = vadd.f32 %v180, %v308
  %v311 = vadd.f32 %v183, %v308
  %v312 = vadd.f32 %v188, %v308
  %v313 = vadd.f32 %v191, %v308
  %v314 = vadd.f32 %v196, %v308
  %v315 = vadd.f32 %v199, %v308
  %v316 = vadd.f32 %v204, %v308
  %v317 = vadd.f32 %v207, %v308
  %v318 = vadd.f32 %v212, %v308
  %v319 = vadd.f32 %v215, %v308
  %v320 = vadd.f32 %v220, %v308
  %v321 = vadd.f32 %v223, %v308
  %v322 = vadd.f32 %v228, %v308
  %v323 = vadd.f32 %v231, %v308
  %v324 = vadd.f32 %v236, %v308
  %v325 = vadd.f32 %v239, %v308
  %v326 = vpack.c.bf16 %v311, %v310
  %v327 = vpack.c.bf16 %v313, %v312
  %v328 = vpack.c.bf16 %v315, %v314
  %v329 = vpack.c.bf16 %v317, %v316
  %v330 = vpack.c.bf16 %v319, %v318
  %v331 = vpack.c.bf16 %v321, %v320
  %v332 = vpack.c.bf16 %v323, %v322
  %v333 = vpack.c.bf16 %v325, %v324
  %v342 = vunpack.c.l.b16 %v326
  %v343 = vunpack.c.h.b16 %v326
  %v344 = vunpack.c.l.b16 %v327
  %v345 = vunpack.c.h.b16 %v327
  %v346 = vunpack.c.l.b16 %v328
  %v347 = vunpack.c.h.b16 %v328
  %v348 = vunpack.c.l.b16 %v329
  %v349 = vunpack.c.h.b16 %v329
  %v350 = vunpack.c.l.b16 %v330
  %v351 = vunpack.c.h.b16 %v330
  %v352 = vunpack.c.l.b16 %v331
  %v353 = vunpack.c.h.b16 %v331
  %v354 = vunpack.c.l.b16 %v332
  %v355 = vunpack.c.h.b16 %v332
  %v356 = vunpack.c.l.b16 %v333
  %v357 = vunpack.c.h.b16 %v333
  %v358 = vpack.c.b16 %v342, %v342
  %v359 = vpack.c.b16 %v343, %v343
  %v360 = vpack.c.b16 %v344, %v344
  %v361 = vpack.c.b16 %v345, %v345
  %v362 = vpack.c.b16 %v346, %v346
  %v363 = vpack.c.b16 %v347, %v347
  %v364 = vpack.c.b16 %v348, %v348
  %v365 = vpack.c.b16 %v349, %v349
  %v366 = vpack.c.b16 %v350, %v350
  %v367 = vpack.c.b16 %v351, %v351
  %v368 = vpack.c.b16 %v352, %v352
  %v369 = vpack.c.b16 %v353, %v353
  %v370 = vpack.c.b16 %v354, %v354
  %v371 = vpack.c.b16 %v355, %v355
  %v372 = vpack.c.b16 %v356, %v356
  %v373 = vpack.c.b16 %v357, %v357
  %390 = vst [vmem:[%s3] sm:$0xf] %v358
  %391 = vst [vmem:[%s3 + $0x4] sm:$0xf] %v359
  %392 = vst [vmem:[%s3 + $0x8] sm:$0xf] %v360
  %393 = vst [vmem:[%s3 + $0xc] sm:$0xf] %v361
  %394 = vst [vmem:[%s3 + $0x10] sm:$0xf] %v362
  %395 = vst [vmem:[%s3 + $0x14] sm:$0xf] %v363
  %396 = vst [vmem:[%s3 + $0x18] sm:$0xf] %v364
  %397 = vst [vmem:[%s3 + $0x1c] sm:$0xf] %v365
  %398 = vst [vmem:[%s3 + $0x20] sm:$0xf] %v366
  %399 = vst [vmem:[%s3 + $0x24] sm:$0xf] %v367
  %400 = vst [vmem:[%s3 + $0x28] sm:$0xf] %v368
  %401 = vst [vmem:[%s3 + $0x2c] sm:$0xf] %v369
  %402 = vst [vmem:[%s3 + $0x30] sm:$0xf] %v370
  %403 = vst [vmem:[%s3 + $0x34] sm:$0xf] %v371
  %404 = vst [vmem:[%s3 + $0x38] sm:$0xf] %v372
  %405 = vst [vmem:[%s3 + $0x3c] sm:$0xf] %v373
  // Predicated region
  $region14: #{double_conv2_forward.3} parent=0 // pred_check
    _
  $region15: #{double_conv2_forward.3} parent=0 // pred_check_branch
    %407 = sbr.rel (0) target = $region17
  $region16: #{double_conv2_forward.3} parent=0 // pred_region
    _
  $region17: #{double_conv2_forward.3} parent=0 // pred_fallthru
    _
  // Predicated region
  $region18: #{double_conv2_forward.3} parent=0 // pred_check
    _
  $region19: #{double_conv2_forward.3} parent=0 // pred_check_branch
    %409 = sbr.rel (0) target = $region21
  $region20: #{double_conv2_forward.3} parent=0 // pred_region
    _
  $region21: #{double_conv2_forward.3} parent=0 // pred_fallthru
    _
  // Predicated region
  $region22: #{double_conv2_forward.3} parent=0 // pred_check
    _
  $region23: #{double_conv2_forward.3} parent=0 // pred_check_branch
    %411 = sbr.rel (0) target = $region25
  $region24: #{double_conv2_forward.3} parent=0 // pred_region
    _
  $region25: #{double_conv2_forward.3} parent=0 // pred_fallthru
    _
  // Predicated region
  $region26: #{double_conv2_forward.3} parent=0 // pred_check
    _
  $region27: #{double_conv2_forward.3} parent=0 // pred_check_branch
    %413 = sbr.rel (0) target = $region29
  $region28: #{double_conv2_forward.3} parent=0 // pred_region
    _
  $region29: #{double_conv2_forward.3} parent=0 // pred_fallthru
    _

// kernel: double_conv2_forward.5
$region0: #{double_conv2_forward.5}
  #allocation0 [shape = 'u32[]', space=smem, size = 0x4, offset = 0x4, fixed_abs, tag = 'smem constant byte address 0x4 - core index']
  #allocation1 [shape = 'u32[144,128]{1,0:T(1,128)}', space=vmem, size = 0x12000, scoped, tag = 'internal scratch']
  %s0 = inlined_call_operand.vmem [shape: bf16[128,128], index: 0, kind: input, shape index: {}]
  %s1 = inlined_call_operand.vmem [shape: f32[1,128], index: 1, kind: input, shape index: {}]
  %s2 = inlined_call_operand.vmem [shape: f32[1,128], index: 2, kind: input, shape index: {}]
  %s3 = inlined_call_operand.vmem [shape: f32[128,128], index: 3, kind: output, shape index: {}]
  %s4 = sld [smem:[#allocation0]]
  $region22: #{double_conv2_forward.5} parent=0
    _
  %s6 = ssub.s32 1, %s4
  %s7 = scalar_select 0, %s6, %s4
  // Predicated region
  $region2: #{double_conv2_forward.5} parent=0 // pred_check
    _
  $region3: #{double_conv2_forward.5} parent=0 // pred_check_branch
    %9 = sbr.rel (0) target = $region5
  $region4: #{double_conv2_forward.5} parent=0 // pred_region
    _
  $region5: #{double_conv2_forward.5} parent=0 // pred_fallthru
    _
  // Predicated region
  $region6: #{double_conv2_forward.5} parent=0 // pred_check
    _
  $region7: #{double_conv2_forward.5} parent=0 // pred_check_branch
    %11 = sbr.rel (0) target = $region9
  $region8: #{double_conv2_forward.5} parent=0 // pred_region
    _
  $region9: #{double_conv2_forward.5} parent=0 // pred_fallthru
    _
  // Predicated region
  $region10: #{double_conv2_forward.5} parent=0 // pred_check
    _
  $region11: #{double_conv2_forward.5} parent=0 // pred_check_branch
    %13 = sbr.rel (0) target = $region13
  $region12: #{double_conv2_forward.5} parent=0 // pred_region
    _
  $region13: #{double_conv2_forward.5} parent=0 // pred_fallthru
    _
  %v14 = vld [vmem:[%s0] sm:$0xf]
  %v15 = vld [vmem:[%s0 + $0x4] sm:$0xf]
  %v16 = vld [vmem:[%s0 + $0x8] sm:$0xf]
  %v17 = vld [vmem:[%s0 + $0xc] sm:$0xf]
  %v18 = vld [vmem:[%s0 + $0x10] sm:$0xf]
  %v19 = vld [vmem:[%s0 + $0x14] sm:$0xf]
  %v20 = vld [vmem:[%s0 + $0x18] sm:$0xf]
  %v21 = vld [vmem:[%s0 + $0x1c] sm:$0xf]
  %v22 = vld [vmem:[%s0 + $0x20] sm:$0xf]
  %v23 = vld [vmem:[%s0 + $0x24] sm:$0xf]
  %v24 = vld [vmem:[%s0 + $0x28] sm:$0xf]
  %v25 = vld [vmem:[%s0 + $0x2c] sm:$0xf]
  %v26 = vld [vmem:[%s0 + $0x30] sm:$0xf]
  %v27 = vld [vmem:[%s0 + $0x34] sm:$0xf]
  %v28 = vld [vmem:[%s0 + $0x38] sm:$0xf]
  %v29 = vld [vmem:[%s0 + $0x3c] sm:$0xf]
  %v30 = vunpack.c.l.bf16 %v14
  %v31 = vunpack.c.l.bf16 %v15
  %v32 = vunpack.c.l.bf16 %v16
  %v33 = vunpack.c.l.bf16 %v17
  %v34 = vunpack.c.l.bf16 %v18
  %v35 = vunpack.c.l.bf16 %v19
  %v36 = vunpack.c.l.bf16 %v20
  %v37 = vunpack.c.l.bf16 %v21
  %v38 = vunpack.c.l.bf16 %v22
  %v39 = vunpack.c.l.bf16 %v23
  %v40 = vunpack.c.l.bf16 %v24
  %v41 = vunpack.c.l.bf16 %v25
  %v42 = vunpack.c.l.bf16 %v26
  %v43 = vunpack.c.l.bf16 %v27
  %v44 = vunpack.c.l.bf16 %v28
  %v45 = vunpack.c.l.bf16 %v29
  %v46 = vld [vmem:[%s1] sm:$0x1]
  %v48 = vlaneseq
  %v49 = vshrl.u32 %v48, 7
  %v50 = vsub.s32 0, %v49
  %v51 = vrot.slane %v46, %v50
  %v53 = vmul.f32 %v30, %v51
  %v54 = vmul.f32 %v31, %v51
  %v55 = vmul.f32 %v32, %v51
  %v56 = vmul.f32 %v33, %v51
  %v57 = vmul.f32 %v34, %v51
  %v58 = vmul.f32 %v35, %v51
  %v59 = vmul.f32 %v36, %v51
  %v60 = vmul.f32 %v37, %v51
  %v61 = vmul.f32 %v38, %v51
  %v62 = vmul.f32 %v39, %v51
  %v63 = vmul.f32 %v40, %v51
  %v64 = vmul.f32 %v41, %v51
  %v65 = vmul.f32 %v42, %v51
  %v66 = vmul.f32 %v43, %v51
  %v67 = vmul.f32 %v44, %v51
  %v68 = vmul.f32 %v45, %v51
  %v69 = vld [vmem:[%s2] sm:$0x1]
  %v71 = vlaneseq
  %v72 = vshrl.u32 %v71, 7
  %v73 = vsub.s32 0, %v72
  %v74 = vrot.slane %v69, %v73
  %v76 = vadd.f32 %v53, %v74
  %v77 = vadd.f32 %v54, %v74
  %v78 = vadd.f32 %v55, %v74
  %v79 = vadd.f32 %v56, %v74
  %v80 = vadd.f32 %v57, %v74
  %v81 = vadd.f32 %v58, %v74
  %v82 = vadd.f32 %v59, %v74
  %v83 = vadd.f32 %v60, %v74
  %v84 = vadd.f32 %v61, %v74
  %v85 = vadd.f32 %v62, %v74
  %v86 = vadd.f32 %v63, %v74
  %v87 = vadd.f32 %v64, %v74
  %v88 = vadd.f32 %v65, %v74
  %v89 = vadd.f32 %v66, %v74
  %v90 = vadd.f32 %v67, %v74
  %v91 = vadd.f32 %v68, %v74
  %v92 = vmax.f32 %v76, 0.0
  %v93 = vmax.f32 %v77, 0.0
  %v94 = vmax.f32 %v78, 0.0
  %v95 = vmax.f32 %v79, 0.0
  %v96 = vmax.f32 %v80, 0.0
  %v97 = vmax.f32 %v81, 0.0
  %v98 = vmax.f32 %v82, 0.0
  %v99 = vmax.f32 %v83, 0.0
  %v100 = vmax.f32 %v84, 0.0
  %v101 = vmax.f32 %v85, 0.0
  %v102 = vmax.f32 %v86, 0.0
  %v103 = vmax.f32 %v87, 0.0
  %v104 = vmax.f32 %v88, 0.0
  %v105 = vmax.f32 %v89, 0.0
  %v106 = vmax.f32 %v90, 0.0
  %v107 = vmax.f32 %v91, 0.0
  %108 = vst [vmem:[%s3] sm:$0xff] %v92
  %109 = vst [vmem:[%s3 + $0x8] sm:$0xff] %v93
  %110 = vst [vmem:[%s3 + $0x10] sm:$0xff] %v94
  %111 = vst [vmem:[%s3 + $0x18] sm:$0xff] %v95
  %112 = vst [vmem:[%s3 + $0x20] sm:$0xff] %v96
  %113 = vst [vmem:[%s3 + $0x28] sm:$0xff] %v97
  %114 = vst [vmem:[%s3 + $0x30] sm:$0xff] %v98
  %115 = vst [vmem:[%s3 + $0x38] sm:$0xff] %v99
  %116 = vst [vmem:[%s3 + $0x40] sm:$0xff] %v100
  %117 = vst [vmem:[%s3 + $0x48] sm:$0xff] %v101
  %118 = vst [vmem:[%s3 + $0x50] sm:$0xff] %v102
  %119 = vst [vmem:[%s3 + $0x58] sm:$0xff] %v103
  %120 = vst [vmem:[%s3 + $0x60] sm:$0xff] %v104
  %121 = vst [vmem:[%s3 + $0x68] sm:$0xff] %v105
  %122 = vst [vmem:[%s3 + $0x70] sm:$0xff] %v106
  %123 = vst [vmem:[%s3 + $0x78] sm:$0xff] %v107
  // Predicated region
  $region14: #{double_conv2_forward.5} parent=0 // pred_check
    _
  $region15: #{double_conv2_forward.5} parent=0 // pred_check_branch
    %125 = sbr.rel (0) target = $region17
  $region16: #{double_conv2_forward.5} parent=0 // pred_region
    _
  $region17: #{double_conv2_forward.5} parent=0 // pred_fallthru
    _
  // Predicated region
  $region18: #{double_conv2_forward.5} parent=0 // pred_check
    _
  $region19: #{double_conv2_forward.5} parent=0 // pred_check_branch
    %127 = sbr.rel (0) target = $region21
  $region20: #{double_conv2_forward.5} parent=0 // pred_region
    _
  $region21: #{double_conv2_forward.5} parent=0 // pred_fallthru
    _

</llo_original>
